<compile_context>
chip_gen: v5e
topology: v5e:2x2
jax: 0.10.0
libtpu: 0.0.40
codegen_flags: <defaults>
</compile_context>

<pallas_src>
import functools

import jax
import jax.numpy as jnp
from jax.experimental import pallas as pl
from jax.experimental.pallas import tpu as pltpu

# "configer" values (the only config the torch module reads). Baked in at trace time.
CAPSULE_LOSS_SIZE_AVERAGE = True   # nn.MSELoss(size_average=...)
_ALPHA = 2.0                       # hard-coded alpha in the torch module
_HW_SPLIT = 2                      # HW-stream split for megacore utilization (v7x)


def _cdiv(a, b):
    return -(-a // b)


def _round_up(a, b):
    return _cdiv(a, b) * b


def _sublane_multiple(dtype):
    # Minimum second-to-last block-dim multiple for packed dtypes: f32->8, bf16->16, int8->32.
    return max(8, 32 // jnp.dtype(dtype).itemsize)


def _vmem_limit_bytes():
    try:
        cap = int(pltpu.get_tpu_info().vmem_capacity_bytes)
    except Exception:
        cap = 64 * 1024 * 1024          # conservative (v7x-sized) fallback
    return min(cap // 2, 48 * 1024 * 1024)


def _capsule_loss_kernel(*refs, has_mask: bool, is_focal: bool):
    if has_mask:
        x_ref, t_ref, m_ref, o_ref, acc_ref = refs
    else:
        x_ref, t_ref, o_ref, acc_ref = refs
        m_ref = None

    j = pl.program_id(2)

    @pl.when(j == 0)
    def _():
        acc_ref[...] = jnp.zeros_like(acc_ref)

    x = x_ref[...].astype(jnp.float32)                  # (C, R, 128), in-kernel upcast
    preds = jnp.sqrt(jnp.sum(x * x, axis=0))            # (R, 128): major-axis VPU adds
    if has_mask:
        preds = preds * m_ref[...].astype(jnp.float32)
    t = t_ref[...].astype(jnp.float32)                  # (R, 128)
    d = preds - t
    contrib = d * d
    if not is_focal:
        contrib = jnp.exp(t * _ALPHA) * contrib         # EUP exp (separate bundle slot)

    # Fold (R, 128) -> (8, 128): free vreg-major split + VPU adds; single-vreg acc RMW.
    rr = contrib.shape[0]
    acc_ref[...] += jnp.sum(contrib.reshape(rr // 8, 8, 128), axis=0)

    @pl.when(j == pl.num_programs(2) - 1)
    def _():
        o_ref[...] = acc_ref[...]                       # one lane-dense vreg store


def capsule_loss(inputs, targets, masks=None, is_focal=False,
                 size_average=CAPSULE_LOSS_SIZE_AVERAGE):
    """inputs: (N, C, H, W); targets/masks: (N, H, W). Returns scalar f32 loss."""
    N, C, H, W = inputs.shape
    HW = H * W
    has_mask = masks is not None

    x = inputs.reshape(N, C, HW)                        # free reshape, native dtype
    t = targets.reshape(N, HW)
    m = None
    if has_mask:
        m = masks.reshape(N, HW)
        if not jnp.issubdtype(m.dtype, jnp.floating):
            m = m.astype(jnp.float32)                   # bool/int masks: small array

    # ---- tiling (generation-aware) ------------------------------------------------
    sub = max(_sublane_multiple(x.dtype), _sublane_multiple(t.dtype),
              _sublane_multiple(m.dtype) if has_mask else 8)
    x_it = jnp.dtype(x.dtype).itemsize
    t_it = jnp.dtype(t.dtype).itemsize
    m_it = jnp.dtype(m.dtype).itemsize if has_mask else 0

    rows_raw = _cdiv(HW, 128)
    per_row_bytes = 128 * (C * x_it + t_it + m_it)

    vmem_limit = _vmem_limit_bytes()
    buf_budget = int(vmem_limit * 0.70)                 # double-buffered input blocks
    r_cap = max(sub, (buf_budget // (2 * per_row_bytes)) // sub * sub)
    r_cap = min(r_cap, 8192)
    r = min(r_cap, _round_up(_cdiv(rows_raw, _HW_SPLIT), sub))
    t_tiles = _cdiv(rows_raw, _HW_SPLIT * r)
    rows_pad = _HW_SPLIT * r * t_tiles
    hw_pad = rows_pad * 128
    # Ensure the explicit limit covers the footprint even for very large C.
    vmem_limit = max(vmem_limit, 2 * per_row_bytes * r + 3 * 8 * 128 * 4 + (2 << 20))

    # ---- zero-pad HW (padded elements contribute exactly 0 to both loss paths) ----
    if hw_pad != HW:
        pad = hw_pad - HW
        x = jnp.pad(x, ((0, 0), (0, 0), (0, pad)))
        t = jnp.pad(t, ((0, 0), (0, pad)))
        if has_mask:
            m = jnp.pad(m, ((0, 0), (0, pad)))
    x = x.reshape(N, C, rows_pad, 128)
    t = t.reshape(N, rows_pad, 128)
    args = [x, t]
    if has_mask:
        args.append(m.reshape(N, rows_pad, 128))

    # ---- specs ---------------------------------------------------------------------
    tt = t_tiles
    in_specs = [
        pl.BlockSpec((None, C, r, 128), lambda n, h, j: (n, 0, h * tt + j, 0)),
        pl.BlockSpec((None, r, 128), lambda n, h, j: (n, h * tt + j, 0)),
    ]
    if has_mask:
        in_specs.append(pl.BlockSpec((None, r, 128), lambda n, h, j: (n, h * tt + j, 0)))

    kernel = functools.partial(_capsule_loss_kernel, has_mask=has_mask,
                               is_focal=bool(is_focal))

    elems = N * HW
    cost = pl.CostEstimate(
        flops=elems * (2 * C + 6),
        transcendentals=elems * (1 if is_focal else 2),
        bytes_accessed=N * HW * (C * x_it + t_it + m_it) + N * _HW_SPLIT * 8 * 128 * 4,
    )

    partials = pl.pallas_call(
        kernel,
        out_shape=jax.ShapeDtypeStruct((N, _HW_SPLIT, 8, 128), jnp.float32),
        grid_spec=pltpu.PrefetchScalarGridSpec(
            num_scalar_prefetch=0,
            grid=(N, _HW_SPLIT, t_tiles),
            in_specs=in_specs,
            out_specs=pl.BlockSpec((None, None, 8, 128), lambda n, h, j: (n, h, 0, 0)),
            scratch_shapes=[pltpu.VMEM((8, 128), jnp.float32)],
        ),
        compiler_params=pltpu.CompilerParams(
            dimension_semantics=("parallel", "parallel", "arbitrary"),
            vmem_limit_bytes=int(vmem_limit),
        ),
        cost_estimate=cost,
    )(*args)

    total = jnp.sum(partials)                  # tiny (N, 2, 8, 128) partial-sum reduce
    if is_focal and not size_average:
        return total                           # MSE with reduction='sum'
    return total / float(N * HW)               # mean over the true N*H*W elements


def capsule_loss_ref(inputs, targets, masks=None, is_focal=False,
                     size_average=CAPSULE_LOSS_SIZE_AVERAGE):
    """Plain-JAX reference mirroring the PyTorch forward."""
    preds = jnp.sqrt(jnp.sum(inputs.astype(jnp.float32) ** 2, axis=1))
    if masks is not None:
        preds = preds * masks.astype(jnp.float32)
    t = targets.astype(jnp.float32)
    d2 = (preds - t) ** 2
    if is_focal:
        return jnp.mean(d2) if size_average else jnp.sum(d2)
    return jnp.mean(jnp.exp(t * _ALPHA) * d2)


if __name__ == "__main__":
    key = jax.random.PRNGKey(0)
    k1, k2, k3 = jax.random.split(key, 3)

    N, C, H, W = 2, 4, 16, 16
    inputs = jax.random.normal(k1, (N, C, H, W), dtype=jnp.float32)
    targets = jax.random.uniform(k2, (N, H, W), dtype=jnp.float32)
    masks = (jax.random.uniform(k3, (N, H, W)) > 0.3).astype(jnp.float32)

    # Default path (is_focal=False) with a mask.
    loss = capsule_loss(inputs, targets, masks=masks, is_focal=False)
    loss = jax.block_until_ready(loss)
    ref = capsule_loss_ref(inputs, targets, masks=masks, is_focal=False)
    assert jnp.allclose(loss, ref, rtol=1e-5, atol=1e-5), (loss, ref)

    # is_focal path (MSE, size_average=True), masks=None (specialized kernel, no mask DMA).
    loss_f = capsule_loss(inputs, targets, masks=None, is_focal=True)
    loss_f = jax.block_until_ready(loss_f)
    ref_f = capsule_loss_ref(inputs, targets, masks=None, is_focal=True)
    assert jnp.allclose(loss_f, ref_f, rtol=1e-5, atol=1e-5), (loss_f, ref_f)

    print("KERNEL_OK")
</pallas_src>

<mosaic_0001>
module attributes {stable_mosaic.version = 11 : i64} {
  func.func @_capsule_loss_kernel(%arg0: i32, %arg1: i32, %arg2: i32, %arg3: memref<1x4x8x128xf32, #tpu.memory_space<vmem>>, %arg4: memref<1x8x128xf32, #tpu.memory_space<vmem>>, %arg5: memref<1x8x128xf32, #tpu.memory_space<vmem>>, %arg6: memref<1x1x8x128xf32, #tpu.memory_space<vmem>>, %arg7: memref<8x128xf32, #tpu.memory_space<vmem>>) attributes {dimension_semantics = [#tpu.dimension_semantics<parallel>, #tpu.dimension_semantics<parallel>, #tpu.dimension_semantics<arbitrary>], iteration_bounds = array<i64: 2, 2, 1>, scalar_prefetch = 0 : i64, scratch_operands = 1 : i64, tpu.core_type = #tpu.core_type<tc>, window_params = [{transform_indices = @transform_0, window_bounds = array<i64: 1, 4, 8, 128>}, {transform_indices = @transform_1, window_bounds = array<i64: 1, 8, 128>}, {transform_indices = @transform_2, window_bounds = array<i64: 1, 8, 128>}, {transform_indices = @transform_3, window_bounds = array<i64: 1, 1, 8, 128>}]} {
    %c0_i32 = arith.constant 0 : i32
    %0 = arith.cmpi eq, %arg2, %c0_i32 : i32
    %1 = arith.extui %0 : i1 to i32
    %c0_i32_0 = arith.constant 0 : i32
    %2 = arith.cmpi ne, %1, %c0_i32_0 : i32
    scf.if %2 {
      %cst_18 = arith.constant 0.000000e+00 : f32
      %27 = vector.broadcast %cst_18 : f32 to vector<8x128xf32>
      %c0_19 = arith.constant 0 : index
      %c0_20 = arith.constant 0 : index
      %28 = vector.load %arg7[%c0_19, %c0_20] : memref<8x128xf32, #tpu.memory_space<vmem>>, vector<8x128xf32>
      tpu.vector_store %arg7[%c0_19, %c0_20], %27 {strides = array<i32>} : memref<8x128xf32, #tpu.memory_space<vmem>>, vector<8x128xf32>,
    } else {
    }
    %c0 = arith.constant 0 : index
    %c0_1 = arith.constant 0 : index
    %c0_2 = arith.constant 0 : index
    %c0_3 = arith.constant 0 : index
    %3 = vector.load %arg3[%c0, %c0_1, %c0_2, %c0_3] : memref<1x4x8x128xf32, #tpu.memory_space<vmem>>, vector<1x4x8x128xf32>
    %4 = vector.shape_cast %3 : vector<1x4x8x128xf32> to vector<4x8x128xf32>
    %5 = arith.mulf %4, %4 : vector<4x8x128xf32>
    %cst = arith.constant dense<0.000000e+00> : vector<8x128xf32>
    %6 = vector.multi_reduction <add>, %5, %cst [0] : vector<4x8x128xf32> to vector<8x128xf32>
    %7 = math.sqrt %6 : vector<8x128xf32>
    %c0_4 = arith.constant 0 : index
    %c0_5 = arith.constant 0 : index
    %c0_6 = arith.constant 0 : index
    %8 = vector.load %arg5[%c0_4, %c0_5, %c0_6] : memref<1x8x128xf32, #tpu.memory_space<vmem>>, vector<1x8x128xf32>
    %9 = vector.shape_cast %8 : vector<1x8x128xf32> to vector<8x128xf32>
    %10 = arith.mulf %7, %9 : vector<8x128xf32>
    %c0_7 = arith.constant 0 : index
    %c0_8 = arith.constant 0 : index
    %c0_9 = arith.constant 0 : index
    %11 = vector.load %arg4[%c0_7, %c0_8, %c0_9] : memref<1x8x128xf32, #tpu.memory_space<vmem>>, vector<1x8x128xf32>
    %12 = vector.shape_cast %11 : vector<1x8x128xf32> to vector<8x128xf32>
    %13 = arith.subf %10, %12 : vector<8x128xf32>
    %14 = arith.mulf %13, %13 : vector<8x128xf32>
    %cst_10 = arith.constant 2.000000e+00 : f32
    %15 = vector.broadcast %cst_10 : f32 to vector<8x128xf32>
    %16 = arith.mulf %12, %15 : vector<8x128xf32>
    %17 = math.exp %16 : vector<8x128xf32>
    %18 = arith.mulf %17, %14 : vector<8x128xf32>
    %c0_11 = arith.constant 0 : index
    %c0_12 = arith.constant 0 : index
    %19 = vector.load %arg7[%c0_11, %c0_12] : memref<8x128xf32, #tpu.memory_space<vmem>>, vector<8x128xf32>
    %20 = vector.shape_cast %18 : vector<8x128xf32> to vector<1x8x128xf32>
    %cst_13 = arith.constant dense<0.000000e+00> : vector<8x128xf32>
    %21 = vector.multi_reduction <add>, %20, %cst_13 [0] : vector<1x8x128xf32> to vector<8x128xf32>
    %22 = arith.addf %19, %21 : vector<8x128xf32>
    %c0_14 = arith.constant 0 : index
    %c0_15 = arith.constant 0 : index
    %23 = vector.load %arg7[%c0_14, %c0_15] : memref<8x128xf32, #tpu.memory_space<vmem>>, vector<8x128xf32>
    tpu.vector_store %arg7[%c0_14, %c0_15], %22 {strides = array<i32>} : memref<8x128xf32, #tpu.memory_space<vmem>>, vector<8x128xf32>,
    %c0_i32_16 = arith.constant 0 : i32
    %24 = arith.cmpi eq, %arg2, %c0_i32_16 : i32
    %25 = arith.extui %24 : i1 to i32
    %c0_i32_17 = arith.constant 0 : i32
    %26 = arith.cmpi ne, %25, %c0_i32_17 : i32
    scf.if %26 {
      %c0_18 = arith.constant 0 : index
      %c0_19 = arith.constant 0 : index
      %27 = vector.load %arg7[%c0_18, %c0_19] : memref<8x128xf32, #tpu.memory_space<vmem>>, vector<8x128xf32>
      %c0_20 = arith.constant 0 : index
      %c0_21 = arith.constant 0 : index
      %c0_22 = arith.constant 0 : index
      %c0_23 = arith.constant 0 : index
      %28 = vector.load %arg6[%c0_20, %c0_21, %c0_22, %c0_23] : memref<1x1x8x128xf32, #tpu.memory_space<vmem>>, vector<1x1x8x128xf32>
      %29 = vector.shape_cast %28 : vector<1x1x8x128xf32> to vector<8x128xf32>
      %30 = vector.shape_cast %27 : vector<8x128xf32> to vector<1x1x8x128xf32>
      tpu.vector_store %arg6[%c0_20, %c0_21, %c0_22, %c0_23], %30 {strides = array<i32>} : memref<1x1x8x128xf32, #tpu.memory_space<vmem>>, vector<1x1x8x128xf32>,
    } else {
    }
    return
  }
  func.func @transform_0(%arg0: i32, %arg1: i32, %arg2: i32) -> (i32, i32, i32, i32) {
    %c1_i32 = arith.constant 1 : i32
    %0 = arith.muli %arg1, %c1_i32 : i32
    %1 = arith.addi %0, %arg2 : i32
    %c0_i32 = arith.constant 0 : i32
    %c0_i32_0 = arith.constant 0 : i32
    %c0_i32_1 = arith.constant 0 : i32
    return %arg0, %c0_i32, %1, %c0_i32_0 : i32, i32, i32, i32
  }
  func.func @transform_1(%arg0: i32, %arg1: i32, %arg2: i32) -> (i32, i32, i32) {
    %c1_i32 = arith.constant 1 : i32
    %0 = arith.muli %arg1, %c1_i32 : i32
    %1 = arith.addi %0, %arg2 : i32
    %c0_i32 = arith.constant 0 : i32
    %c0_i32_0 = arith.constant 0 : i32
    return %arg0, %1, %c0_i32 : i32, i32, i32
  }
  func.func @transform_2(%arg0: i32, %arg1: i32, %arg2: i32) -> (i32, i32, i32) {
    %c1_i32 = arith.constant 1 : i32
    %0 = arith.muli %arg1, %c1_i32 : i32
    %1 = arith.addi %0, %arg2 : i32
    %c0_i32 = arith.constant 0 : i32
    %c0_i32_0 = arith.constant 0 : i32
    return %arg0, %1, %c0_i32 : i32, i32, i32
  }
  func.func @transform_3(%arg0: i32, %arg1: i32, %arg2: i32) -> (i32, i32, i32, i32) {
    %c0_i32 = arith.constant 0 : i32
    %c0_i32_0 = arith.constant 0 : i32
    %c0_i32_1 = arith.constant 0 : i32
    return %arg0, %arg1, %c0_i32, %c0_i32_0 : i32, i32, i32, i32
  }
}

</mosaic_0001>

<llo_original>
// kernel: tpu_custom_call.1
$region0: #{tpu_custom_call.1}
  #allocation0 [shape = 'u32[]', space=smem, size = 0x4, offset = 0x4, fixed_abs, tag = 'smem constant byte address 0x4 - core index']
  #allocation1 [shape = 'u32[72,128]{1,0:T(1,128)}', space=vmem, size = 0x9000, scoped, tag = 'internal scratch']
  #allocation2 [shape = 'f32[8,128]{1,0:T(8,128)}', space=vmem, size = 0x1000, scoped, tag = 'scratch operand']
  %s0 = inlined_call_operand.hbm [shape: f32[2,4,16,128], index: 0, kind: input, shape index: {}]
  %s1 = inlined_call_operand.hbm [shape: f32[2,16,128], index: 1, kind: input, shape index: {}]
  %s2 = inlined_call_operand.hbm [shape: f32[2,16,128], index: 2, kind: input, shape index: {}]
  %s3 = inlined_call_operand.hbm [shape: f32[2,2,8,128], index: 3, kind: output, shape index: {}]
  %s4 = sld [smem:[#allocation0]]
  $region65: #{tpu_custom_call.1} parent=0
    _
  %s6 = ssub.s32 1, %s4
  %s7 = scalar_select 0, %s6, %s4
  $region1: #{tpu_custom_call.1} parent=0
    #allocation3 [shape = 'u8[32768]{0}', space=vmem, size = 0x8000, scoped, tag = 'input window, operand 0']
    #allocation4 [shape = 's32[2]{0}', space=sflag, size = 0x8, scoped, tag = 'scoped memory for tpu_custom_call.1']
    #allocation5 [shape = 's32[2]{0}', space=sflag, size = 0x8, scoped, tag = 'scoped memory for tpu_custom_call.1']
    #allocation6 [shape = 'u8[8192]{0}', space=vmem, size = 0x2000, scoped, tag = 'input window, operand 1']
    #allocation7 [shape = 's32[2]{0}', space=sflag, size = 0x8, scoped, tag = 'scoped memory for tpu_custom_call.1']
    #allocation8 [shape = 'u8[8192]{0}', space=vmem, size = 0x2000, scoped, tag = 'input window, operand 2']
    #allocation9 [shape = 'u8[8192]{0}', space=vmem, size = 0x2000, scoped, tag = 'output window, operand 0']
    %8 = vsyncpa [#allocation4], 0
    %s9 = scalar_lea.sflag [#allocation4], 1
    %10 = vsyncpa %s9, 0
    %11 = vsyncpa [#allocation7], 0
    %s12 = scalar_lea.sflag [#allocation7], 1
    %13 = vsyncpa %s12, 0
    %14 = vsyncpa [#allocation5], 0
    %s15 = scalar_lea.sflag [#allocation5], 1
    %16 = vsyncpa %s15, 0
    loop: start=0, step=1, limit=6
    $region2: #{tpu_custom_call.1} parent=1 // loop_pre_header
      _
    $region3: #{tpu_custom_call.1} parent=1 // loop_header
      %s18 = sphi 0, %s22
      %p19 = scmp.ge.s32.totalorder %s18, 6
      %s25 = sphi 0, %s44
      %s26 = sphi 0, %s40
      %s27 = sphi 0, %s36
      %s28 = sphi 0, %s25
      %s29 = sphi 0, %s26
      %s30 = sphi 0, %s27
      %s31 = sphi 0, %s28
      %s32 = sphi 0, %s29
      %s33 = sphi 0, %s30
      %s51 = sphi 0, %s53
      %s54 = sphi 0, %s51
      %s55 = sphi 0, %s54
      %s71 = sphi 0, %s55
      %s81 = sphi 0, %s83
      %s84 = sphi 0, %s81
      %s85 = sphi 0, %s84
      %s101 = sphi 0, %s85
      %s111 = sphi 0, %s113
      %s114 = sphi 0, %s111
      %s115 = sphi 0, %s114
      %s131 = sphi 0, %s115
      %s139 = sphi 0, %s141
      %s142 = sphi 0, %s139
      %s143 = sphi 0, %s142
      %s159 = sphi 0, %s143
    $region4: #{tpu_custom_call.1} parent=1 // loop_header_branch
      %21 = sbr.rel (%p19) target = $region8
    $region5: #{tpu_custom_call.1} parent=1 // loop_body
      %s23 = ssub.s32 %s18, 1
      %s24 = ssub.s32 %s18, 2
      %s34 = sadd.s32 1, %s27
      %p35 = scmp.ge.s32.totalorder %s34, 1
      %s36 = scalar_select %p35, 0, %s34
      %s37 = sadd.s32 1, %s26
      %s38 = scalar_select %p35, %s37, %s26
      %p39 = scmp.ge.s32.totalorder %s38, 2
      %s40 = scalar_select %p39, 0, %s38
      %s41 = sadd.s32 1, %s25
      %s42 = scalar_select %p39, %s41, %s25
      %p43 = scmp.ge.s32.totalorder %s42, 2
      %s44 = scalar_select %p43, 0, %s42
      %s45 = sadd.s32 %s26, %s27
      %s46 = sadd.s32 %s40, %s36
      %s47 = ssub.s32 %s25, %s44
      %s48 = ssub.s32 %s45, %s46
      %s49 = sor.u32 %s47, %s48
      %p50 = scmp.eq.s32.totalorder %s49, 0
      %s52 = sadd.s32 %s51, 1
      %s53 = scalar_select %p50, %s51, %s52
      %p56 = pneg %p50
      %p57 = scmp.eq.s32.totalorder %s18, 3
      %p58 = por %p56, %p57
      %p59 = scmp.ne.s32.totalorder %s51, %s54
      %p60 = scmp.eq.s32.totalorder %s18, 0
      %p61 = por %p59, %p60
      %p62 = scmp.ne.s32.totalorder %s51, %s54
      %p63 = scmp.eq.s32.totalorder %s23, 3
      %p64 = por %p62, %p63
      %p65 = scmp.ne.s32.totalorder %s54, %s55
      %p66 = scmp.eq.s32.totalorder %s23, 0
      %p67 = por %p65, %p66
      %p68 = scmp.ne.s32.totalorder %s54, %s55
      %p69 = scmp.eq.s32.totalorder %s24, 3
      %p70 = por %p68, %p69
      %p72 = scmp.ne.s32.totalorder %s55, %s71
      %p73 = scmp.eq.s32.totalorder %s24, 0
      %p74 = por %p72, %p73
      %s75 = sadd.s32 %s26, %s27
      %s76 = sadd.s32 %s40, %s36
      %s77 = ssub.s32 %s25, %s44
      %s78 = ssub.s32 %s75, %s76
      %s79 = sor.u32 %s77, %s78
      %p80 = scmp.eq.s32.totalorder %s79, 0
      %s82 = sadd.s32 %s81, 1
      %s83 = scalar_select %p80, %s81, %s82
      %p86 = pneg %p80
      %p87 = scmp.eq.s32.totalorder %s18, 3
      %p88 = por %p86, %p87
      %p89 = scmp.ne.s32.totalorder %s81, %s84
      %p90 = scmp.eq.s32.totalorder %s18, 0
      %p91 = por %p89, %p90
      %p92 = scmp.ne.s32.totalorder %s81, %s84
      %p93 = scmp.eq.s32.totalorder %s23, 3
      %p94 = por %p92, %p93
      %p95 = scmp.ne.s32.totalorder %s84, %s85
      %p96 = scmp.eq.s32.totalorder %s23, 0
      %p97 = por %p95, %p96
      %p98 = scmp.ne.s32.totalorder %s84, %s85
      %p99 = scmp.eq.s32.totalorder %s24, 3
      %p100 = por %p98, %p99
      %p102 = scmp.ne.s32.totalorder %s85, %s101
      %p103 = scmp.eq.s32.totalorder %s24, 0
      %p104 = por %p102, %p103
      %s105 = sadd.s32 %s26, %s27
      %s106 = sadd.s32 %s40, %s36
      %s107 = ssub.s32 %s25, %s44
      %s108 = ssub.s32 %s105, %s106
      %s109 = sor.u32 %s107, %s108
      %p110 = scmp.eq.s32.totalorder %s109, 0
      %s112 = sadd.s32 %s111, 1
      %s113 = scalar_select %p110, %s111, %s112
      %p116 = pneg %p110
      %p117 = scmp.eq.s32.totalorder %s18, 3
      %p118 = por %p116, %p117
      %p119 = scmp.ne.s32.totalorder %s111, %s114
      %p120 = scmp.eq.s32.totalorder %s18, 0
      %p121 = por %p119, %p120
      %p122 = scmp.ne.s32.totalorder %s111, %s114
      %p123 = scmp.eq.s32.totalorder %s23, 3
      %p124 = por %p122, %p123
      %p125 = scmp.ne.s32.totalorder %s114, %s115
      %p126 = scmp.eq.s32.totalorder %s23, 0
      %p127 = por %p125, %p126
      %p128 = scmp.ne.s32.totalorder %s114, %s115
      %p129 = scmp.eq.s32.totalorder %s24, 3
      %p130 = por %p128, %p129
      %p132 = scmp.ne.s32.totalorder %s115, %s131
      %p133 = scmp.eq.s32.totalorder %s24, 0
      %p134 = por %p132, %p133
      %s135 = ssub.s32 %s25, %s44
      %s136 = ssub.s32 %s26, %s40
      %s137 = sor.u32 %s135, %s136
      %p138 = scmp.eq.s32.totalorder %s137, 0
      %s140 = sadd.s32 %s139, 1
      %s141 = scalar_select %p138, %s139, %s140
      %p144 = pneg %p138
      %p145 = scmp.eq.s32.totalorder %s18, 3
      %p146 = por %p144, %p145
      %p147 = scmp.ne.s32.totalorder %s139, %s142
      %p148 = scmp.eq.s32.totalorder %s18, 0
      %p149 = por %p147, %p148
      %p150 = scmp.ne.s32.totalorder %s139, %s142
      %p151 = scmp.eq.s32.totalorder %s23, 3
      %p152 = por %p150, %p151
      %p153 = scmp.ne.s32.totalorder %s142, %s143
      %p154 = scmp.eq.s32.totalorder %s23, 0
      %p155 = por %p153, %p154
      %p156 = scmp.ne.s32.totalorder %s142, %s143
      %p157 = scmp.eq.s32.totalorder %s24, 3
      %p158 = por %p156, %p157
      %p160 = scmp.ne.s32.totalorder %s143, %s159
      %p161 = scmp.eq.s32.totalorder %s24, 0
      %p162 = por %p160, %p161
      %p163 = scmp.le.s32.totalorder 1, %s18
      %p164 = scmp.lt.s32.totalorder %s18, 5
      %p165 = pnand %p163, %p164
      %p166 = pneg %p165
      // Predicated region
      $region9: #{tpu_custom_call.1} parent=5 // pred_check
        _
      $region10: #{tpu_custom_call.1} parent=5 // pred_check_branch
        %168 = sbr.rel (%p165) target = $region12
      $region11: #{tpu_custom_call.1} parent=5 // pred_region
        %s169 = ssub.s32 %s18, 1
      $region12: #{tpu_custom_call.1} parent=5 // pred_fallthru
        _
      %p170 = scmp.lt.s32.totalorder %s18, 4
      // Predicated region
      $region13: #{tpu_custom_call.1} parent=5 // pred_check
        %p171 = pneg %p170
      $region14: #{tpu_custom_call.1} parent=5 // pred_check_branch
        %173 = sbr.rel (%p171) target = $region16
      $region15: #{tpu_custom_call.1} parent=5 // pred_region
        // Predicated region
        $region17: #{tpu_custom_call.1} parent=15 // pred_check
          %p174 = pneg %p61
        $region18: #{tpu_custom_call.1} parent=15 // pred_check_branch
          %176 = sbr.rel (%p174) target = $region20
        $region19: #{tpu_custom_call.1} parent=15 // pred_region
          %s177 = sand.u32 %s51, 1
          %s178 = scalar_lea.sflag [#allocation4], %s177
          %s179 = sand.u32 %s51, 1
          %s180 = smul.addr %s179, 32
          %s181 = scalar_lea.vmem [#allocation3], %s180
          %s182 = sadd.s32 %s26, %s27
          %184 = vsyncadd %s178, 0
          %s185 = smul.addr %s25, 8
          %s186 = sadd.s32 %s182, %s185
          %s187 = smul.addr %s186, 8
          %s188 = scalar_lea.hbm %s0, %s187
          %s189 = sshll.u32 %s188, 4
          %s190 = int_to_ptr.hbm [resolvable:$true] %s189
          %s191 = sshll.u32 %s181, 4
          %s192 = int_to_ptr.vmem [resolvable:$true] %s191
          %197 = dma.hbm_to_vmem [thread:$0]  %s190, 512, %s192, %s178, 256, 128, 8
        $region20: #{tpu_custom_call.1} parent=15 // pred_fallthru
          _
        // Predicated region
        $region21: #{tpu_custom_call.1} parent=15 // pred_check
          %p198 = pneg %p91
        $region22: #{tpu_custom_call.1} parent=15 // pred_check_branch
          %200 = sbr.rel (%p198) target = $region24
        $region23: #{tpu_custom_call.1} parent=15 // pred_region
          %s201 = sand.u32 %s18, 1
          %s202 = scalar_lea.sflag [#allocation7], %s201
          %s203 = sand.u32 %s81, 1
          %s204 = smul.addr %s203, 8
          %s205 = scalar_lea.vmem [#allocation6], %s204
          %s206 = sadd.s32 %s26, %s27
          %208 = vsyncadd %s202, 0
          %s209 = smul.addr %s25, 2
          %s210 = sadd.s32 %s206, %s209
          %s211 = smul.addr %s210, 8
          %s212 = scalar_lea.hbm %s1, %s211
          %s214 = sshll.u32 %s212, 4
          %s215 = int_to_ptr.hbm [resolvable:$true] %s214
          %s216 = sshll.u32 %s205, 4
          %s217 = int_to_ptr.vmem [resolvable:$true] %s216
          %219 = dma.hbm_to_vmem [thread:$0]  %s215, 128, %s217, %s202
        $region24: #{tpu_custom_call.1} parent=15 // pred_fallthru
          _
        // Predicated region
        $region25: #{tpu_custom_call.1} parent=15 // pred_check
          %p220 = pneg %p121
        $region26: #{tpu_custom_call.1} parent=15 // pred_check_branch
          %222 = sbr.rel (%p220) target = $region28
        $region27: #{tpu_custom_call.1} parent=15 // pred_region
          %s223 = sand.u32 %s18, 1
          %s224 = scalar_lea.sflag [#allocation7], %s223
          %s225 = sand.u32 %s111, 1
          %s226 = smul.addr %s225, 8
          %s227 = scalar_lea.vmem [#allocation8], %s226
          %s228 = sadd.s32 %s26, %s27
          %230 = vsyncadd %s224, 0
          %s231 = smul.addr %s25, 2
          %s232 = sadd.s32 %s228, %s231
          %s233 = smul.addr %s232, 8
          %s234 = scalar_lea.hbm %s2, %s233
          %s236 = sshll.u32 %s234, 4
          %s237 = int_to_ptr.hbm [resolvable:$true] %s236
          %s238 = sshll.u32 %s227, 4
          %s239 = int_to_ptr.vmem [resolvable:$true] %s238
          %241 = dma.hbm_to_vmem [thread:$0]  %s237, 128, %s239, %s224
        $region28: #{tpu_custom_call.1} parent=15 // pred_fallthru
          _
      $region16: #{tpu_custom_call.1} parent=5 // pred_fallthru
        _
      %p242 = scmp.le.s32.totalorder 1, %s18
      %p243 = scmp.lt.s32.totalorder %s18, 5
      %p244 = pnand %p242, %p243
      %p245 = pneg %p244
      // Predicated region
      $region29: #{tpu_custom_call.1} parent=5 // pred_check
        _
      $region30: #{tpu_custom_call.1} parent=5 // pred_check_branch
        %247 = sbr.rel (%p244) target = $region32
      $region31: #{tpu_custom_call.1} parent=5 // pred_region
        %s248 = ssub.s32 %s18, 1
        %s249 = sand.u32 %s54, 1
        %s250 = scalar_lea.sflag [#allocation4], %s249
        %s251 = sand.u32 %s54, 1
        %s252 = smul.addr %s251, 32
        %s253 = scalar_lea.vmem [#allocation3], %s252
        // Predicated region
        $region33: #{tpu_custom_call.1} parent=31 // pred_check
          %p254 = pneg %p67
        $region34: #{tpu_custom_call.1} parent=31 // pred_check_branch
          %256 = sbr.rel (%p254) target = $region36
        $region35: #{tpu_custom_call.1} parent=31 // pred_region
          %258 = dma.done %s250, 512
        $region36: #{tpu_custom_call.1} parent=31 // pred_fallthru
          _
        %s259 = sand.u32 %s23, 1
        %s260 = scalar_lea.sflag [#allocation7], %s259
        %s261 = sand.u32 %s84, 1
        %s262 = smul.addr %s261, 8
        %s263 = scalar_lea.vmem [#allocation6], %s262
        // Predicated region
        $region37: #{tpu_custom_call.1} parent=31 // pred_check
          %p264 = pneg %p97
        $region38: #{tpu_custom_call.1} parent=31 // pred_check_branch
          %266 = sbr.rel (%p264) target = $region40
        $region39: #{tpu_custom_call.1} parent=31 // pred_region
          %268 = dma.done %s260, 128
        $region40: #{tpu_custom_call.1} parent=31 // pred_fallthru
          _
        %s269 = sand.u32 %s23, 1
        %s270 = scalar_lea.sflag [#allocation7], %s269
        %s271 = sand.u32 %s114, 1
        %s272 = smul.addr %s271, 8
        %s273 = scalar_lea.vmem [#allocation8], %s272
        // Predicated region
        $region41: #{tpu_custom_call.1} parent=31 // pred_check
          %p274 = pneg %p127
        $region42: #{tpu_custom_call.1} parent=31 // pred_check_branch
          %276 = sbr.rel (%p274) target = $region44
        $region43: #{tpu_custom_call.1} parent=31 // pred_region
          %278 = dma.done %s270, 128
        $region44: #{tpu_custom_call.1} parent=31 // pred_fallthru
          _
        %s279 = sand.u32 %s54, 1
        %s280 = scalar_lea.sflag [#allocation4], %s279
        %s281 = sand.u32 %s54, 1
        %s282 = smul.addr %s281, 32
        %s283 = scalar_lea.vmem [#allocation3], %s282
        %p284 = pneg %p67
        %p285 = pneg %p64
        %s286 = sand.u32 %s23, 1
        %s287 = scalar_lea.sflag [#allocation7], %s286
        %s288 = sand.u32 %s84, 1
        %s289 = smul.addr %s288, 8
        %s290 = scalar_lea.vmem [#allocation6], %s289
        %p291 = pneg %p97
        %p292 = pneg %p94
        %s293 = sand.u32 %s23, 1
        %s294 = scalar_lea.sflag [#allocation7], %s293
        %s295 = sand.u32 %s114, 1
        %s296 = smul.addr %s295, 8
        %s297 = scalar_lea.vmem [#allocation8], %s296
        %p298 = pneg %p127
        %p299 = pneg %p124
        %p300 = pneg %p155
        %p301 = pneg %p152
        %s302 = sand.u32 %s142, 1
        %s303 = scalar_lea.sflag [#allocation5], %s302
        %s304 = sand.u32 %s142, 1
        %s305 = smul.addr %s304, 8
        %s306 = scalar_lea.vmem [#allocation9], %s305
        %s307 = sadd.s32 %s29, %s30
        %s308 = sadd.s32 %s29, %s30
        %s309 = sadd.s32 %s29, %s30
        %p310 = scmp.eq.s32.totalorder %s30, 0
        // Predicated region
        $region45: #{tpu_custom_call.1} parent=31 // pred_check
          %p311 = pneg %p310
        $region46: #{tpu_custom_call.1} parent=31 // pred_check_branch
          %313 = sbr.rel (%p311) target = $region48
        $region47: #{tpu_custom_call.1} parent=31 // pred_region
          %314 = vst [vmem:[#allocation2] sm:$0xff] 0.0
        $region48: #{tpu_custom_call.1} parent=31 // pred_fallthru
          _
        %v315 = vld [vmem:[%s253] sm:$0xff]
        %v316 = vld [vmem:[%s253 + $0x8] sm:$0xff]
        %v317 = vld [vmem:[%s253 + $0x10] sm:$0xff]
        %v318 = vld [vmem:[%s253 + $0x18] sm:$0xff]
        %v319 = vmul.f32 %v315, %v315
        %v320 = vmul.f32 %v316, %v316
        %v321 = vmul.f32 %v317, %v317
        %v322 = vmul.f32 %v318, %v318
        %v323 = vadd.f32 %v319, %v320
        %v324 = vadd.f32 %v323, %v321
        %v325 = vadd.f32 %v324, %v322
        %v326 = vrsqrt.pop %v325
        %v327 = vmul.f32 %v326, %v325
        %v328 = vmul.f32 %v327, %v326
        %v329 = vmul.f32 0.5, %v328
        %v330 = vsub.f32 1.5, %v329
        %v331 = vmul.f32 %v326, %v330
        %v332 = vmul.f32 %v325, %v331
        %vm333 = vcmp.eq.f32.partialorder %v325, inf
        %v334 = vsel %vm333, %v325, %v332
        %vm335 = vcmp.eq.f32.partialorder %v325, 0.0
        %v336 = vand.u32 %v325, 2147483648
        %v337 = vsel %vm335, %v336, %v334
        %v338 = vld [vmem:[%s273] sm:$0xff]
        %v339 = vmul.f32 %v337, %v338
        %v340 = vld [vmem:[%s263] sm:$0xff]
        %v341 = vsub.f32 %v339, %v340
        %v342 = vmul.f32 %v341, %v341
        %v343 = vmul.f32 %v340, 2.0
        %v344 = vmul.f32 %v343, 1.442695
        %v345 = vpow.pop %v344
        %v346 = vmul.f32 %v345, %v342
        %v347 = vld [vmem:[#allocation2] sm:$0xff]
        %v348 = vadd.f32 %v346, 0.0
        %v349 = vadd.f32 %v347, %v348
        %350 = vst [vmem:[#allocation2] sm:$0xff] %v349
        // Predicated region
        $region49: #{tpu_custom_call.1} parent=31 // pred_check
          %p351 = pneg %p310
        $region50: #{tpu_custom_call.1} parent=31 // pred_check_branch
          %353 = sbr.rel (%p351) target = $region52
        $region51: #{tpu_custom_call.1} parent=31 // pred_region
          %v354 = vld [vmem:[#allocation2] sm:$0xff]
          %355 = vst [vmem:[%s306] sm:$0xff] %v354
        $region52: #{tpu_custom_call.1} parent=31 // pred_fallthru
          _
        %s356 = sand.u32 %s142, 1
        %s357 = scalar_lea.sflag [#allocation5], %s356
        %s358 = sand.u32 %s142, 1
        %s359 = smul.addr %s358, 8
        %s360 = scalar_lea.vmem [#allocation9], %s359
        // Predicated region
        $region53: #{tpu_custom_call.1} parent=31 // pred_check
          %p361 = pneg %p152
        $region54: #{tpu_custom_call.1} parent=31 // pred_check_branch
          %363 = sbr.rel (%p361) target = $region56
        $region55: #{tpu_custom_call.1} parent=31 // pred_region
          %365 = vsyncadd %s357, 0
          %s366 = smul.addr %s28, 2
          %s367 = sadd.s32 %s29, %s366
          %s368 = smul.addr %s367, 8
          %s369 = scalar_lea.hbm %s3, %s368
          %s371 = sshll.u32 %s360, 4
          %s372 = int_to_ptr.vmem [resolvable:$true] %s371
          %s373 = sshll.u32 %s369, 4
          %s374 = int_to_ptr.hbm [resolvable:$true] %s373
          %376 = dma.vmem_to_hbm [thread:$0]  %s372, 128, %s374, %s357
        $region56: #{tpu_custom_call.1} parent=31 // pred_fallthru
          _
      $region32: #{tpu_custom_call.1} parent=5 // pred_fallthru
        _
      %p377 = scmp.le.s32.totalorder 2, %s18
      // Predicated region
      $region57: #{tpu_custom_call.1} parent=5 // pred_check
        %p378 = pneg %p377
      $region58: #{tpu_custom_call.1} parent=5 // pred_check_branch
        %380 = sbr.rel (%p378) target = $region60
      $region59: #{tpu_custom_call.1} parent=5 // pred_region
        %s381 = ssub.s32 %s18, 2
        // Predicated region
        $region61: #{tpu_custom_call.1} parent=59 // pred_check
          %p382 = pneg %p158
        $region62: #{tpu_custom_call.1} parent=59 // pred_check_branch
          %384 = sbr.rel (%p382) target = $region64
        $region63: #{tpu_custom_call.1} parent=59 // pred_region
          %s385 = sand.u32 %s143, 1
          %s386 = scalar_lea.sflag [#allocation5], %s385
          %s387 = sand.u32 %s143, 1
          %s388 = smul.addr %s387, 8
          %s389 = scalar_lea.vmem [#allocation9], %s388
          %391 = dma.done %s386, 128
        $region64: #{tpu_custom_call.1} parent=59 // pred_fallthru
          _
      $region60: #{tpu_custom_call.1} parent=5 // pred_fallthru
        _
    $region6: #{tpu_custom_call.1} parent=1 // loop_footer
      %s22 = sadd.s32 1, %s18
    $region7: #{tpu_custom_call.1} parent=1 // loop_footer_branch
      %17 = sbr.rel target = $region3
    $region8: #{tpu_custom_call.1} parent=1 // loop_exit
      _
    %392 = vsyncpa [#allocation4], 1
    %s393 = scalar_lea.sflag [#allocation4], 1
    %394 = vsyncpa %s393, 1
    %395 = vsyncpa [#allocation7], 1
    %s396 = scalar_lea.sflag [#allocation7], 1
    %397 = vsyncpa %s396, 1
    %398 = vsyncpa [#allocation5], 1
    %s399 = scalar_lea.sflag [#allocation5], 1
    %400 = vsyncpa %s399, 1

</llo_original>
